<compile_context>
chip_gen: v7x
topology: tpu7x:2x2x1
jax: 0.10.0
libtpu: 0.0.40
codegen_flags: <defaults>
</compile_context>

<pallas_src>
from functools import partial

import jax
import jax.numpy as jnp
from jax.experimental import pallas as pl
from jax.experimental.pallas import tpu as pltpu

BN_EPS = 1e-5
LANE = 128
SUBLANE_F32 = 8


def _round_up(n, m):
    return (n + m - 1) // m * m


def fcnet_kernel(x_ref, w1_ref, gamma_ref, beta_ref, w2_ref, b2_ref,
                 out_sig_ref, out_hid_ref):
    # ---- fc1 in f32 (no bias: cancelled exactly by the BN batch mean) ----
    h = jnp.dot(x_ref[...], w1_ref[...],
                preferred_element_type=jnp.float32)             # (B, Hp) f32

    # ---- BatchNorm1d, training-mode batch stats (biased variance) ----
    # Folded into one per-feature scale/shift so the big (B, Hp) tensor only
    # sees a single mul + add.
    mean = jnp.mean(h, axis=0, keepdims=True)                   # (1, Hp)
    centered = h - mean
    var = jnp.mean(centered * centered, axis=0, keepdims=True)  # (1, Hp)
    scale = gamma_ref[...] * jax.lax.rsqrt(var + BN_EPS)        # (1, Hp)
    shift = beta_ref[...] - mean * scale                        # (1, Hp)

    # ---- BN apply + ReLU (all f32 elementwise; cast only at the store) ----
    hidden = jnp.maximum(h * scale + shift, 0.0)                # (B, Hp) f32
    out_hid_ref[...] = hidden.astype(out_hid_ref.dtype)

    # ---- fc2 + Sigmoid (only the MXU operands are bf16; math stays f32) ----
    w2 = w2_ref[...]
    o = jnp.dot(hidden.astype(w2.dtype), w2,
                preferred_element_type=jnp.float32) + b2_ref[...]
    out_sig_ref[...] = jax.nn.sigmoid(o)


@partial(jax.jit, static_argnames=("hidden_1", "op_dim", "hidden_dtype"))
def fcnet_forward(x, prepared_params, hidden_1, op_dim,
                  hidden_dtype=jnp.float32):
    """x: (B, input_dim) float32.

    Returns (sigmoid_out (B, op_dim), hidden (B, hidden_1)), matching the
    PyTorch module's (output2, output).  Everything (input pad, pallas_call,
    output de-pad slices) runs inside one jitted XLA program."""
    w1, gamma, beta, w2, b2 = prepared_params
    B = x.shape[0]
    kp = w1.shape[0]     # sublane-padded contraction dim of fc1
    hp = w1.shape[1]     # lane-padded hidden width
    npad = w2.shape[1]   # lane-padded op_dim width

    # Boundary pad of x's contraction dim (zero columns -> identical dot).
    if x.shape[1] < kp:
        x = jnp.pad(x, ((0, 0), (0, kp - x.shape[1])))

    vmem = pl.BlockSpec(memory_space=pltpu.MemorySpace.VMEM)
    out_sig_p, out_hid_p = pl.pallas_call(
        fcnet_kernel,
        out_shape=(
            jax.ShapeDtypeStruct((B, npad), jnp.float32),
            jax.ShapeDtypeStruct((B, hp), hidden_dtype),
        ),
        in_specs=[vmem] * 6,
        out_specs=(vmem, vmem),
    )(x, w1, gamma, beta, w2, b2)
    # Strip lane padding (fused into the same XLA program by jit).
    return out_sig_p[:, :op_dim], out_hid_p[:, :hidden_1]


def init_params(key, input_dim, hidden_1, op_dim):
    """PyTorch-style uniform(-1/sqrt(fan_in), 1/sqrt(fan_in)) init.

    Weights are in (in, out) layout (transposed vs. PyTorch).  Unpadded / f32;
    used directly by the reference and fed through prepare_params for the
    kernel."""
    k1, k2, k3, k4 = jax.random.split(key, 4)
    bound1 = 1.0 / (input_dim ** 0.5)
    bound2 = 1.0 / (hidden_1 ** 0.5)
    w1 = jax.random.uniform(k1, (input_dim, hidden_1), jnp.float32, -bound1, bound1)
    b1 = jax.random.uniform(k2, (1, hidden_1), jnp.float32, -bound1, bound1)
    w2 = jax.random.uniform(k3, (hidden_1, op_dim), jnp.float32, -bound2, bound2)
    b2 = jax.random.uniform(k4, (1, op_dim), jnp.float32, -bound2, bound2)
    gamma = jnp.ones((1, hidden_1), jnp.float32)   # BatchNorm1d weight init
    beta = jnp.zeros((1, hidden_1), jnp.float32)   # BatchNorm1d bias init
    return w1, b1, gamma, beta, w2, b2


def prepare_params(raw_params, fc2_dtype=jnp.bfloat16):
    """Kernel-side parameter prep:
      * drop b1 (cancelled exactly by training-mode BN batch mean),
      * keep w1 in f32 (accuracy: bf16 error before BN is amplified by
        rsqrt(var); K=21 makes f32 free on the MXU),
      * zero-pad w1's contraction dim to a sublane multiple and all feature
        dims to 128-lane multiples,
      * cast only the fc2 weight to `fc2_dtype` (bf16 MXU path, halves its
        DMA bytes); gamma/beta/b2 stay f32.
    Padded gamma/beta lanes and padded w2 rows MUST stay zero so padded
    hidden lanes are exactly 0 and contribute nothing to fc2."""
    w1, b1, gamma, beta, w2, b2 = raw_params
    del b1
    input_dim, hidden_1 = w1.shape
    _, op_dim = w2.shape
    kp = _round_up(input_dim, SUBLANE_F32)
    hp = _round_up(hidden_1, LANE)
    npad = _round_up(op_dim, LANE)
    w1p = jnp.zeros((kp, hp), jnp.float32).at[:input_dim, :hidden_1].set(w1)
    gammap = jnp.zeros((1, hp), jnp.float32).at[:, :hidden_1].set(gamma)
    betap = jnp.zeros((1, hp), jnp.float32).at[:, :hidden_1].set(beta)
    w2p = jnp.zeros((hp, npad), fc2_dtype).at[:hidden_1, :op_dim].set(
        w2.astype(fc2_dtype))
    b2p = jnp.zeros((1, npad), jnp.float32).at[:, :op_dim].set(b2)
    return (w1p, gammap, betap, w2p, b2p)


def reference_forward(x, raw_params):
    """Pure-JAX mirror of the PyTorch module (fc1 bias included)."""
    w1, b1, gamma, beta, w2, b2 = raw_params
    h = x @ w1 + b1
    mean = jnp.mean(h, axis=0, keepdims=True)
    var = jnp.mean((h - mean) ** 2, axis=0, keepdims=True)
    hidden = jnp.maximum((h - mean) / jnp.sqrt(var + BN_EPS) * gamma + beta, 0.0)
    o1 = hidden @ w2 + b2
    return jax.nn.sigmoid(o1), hidden


if __name__ == "__main__":
    # Shapes implied by the module: input_dim=21, hidden=200, op_dim=17.
    B, input_dim, hidden_1, op_dim = 8, 21, 200, 17   # B multiple of 8 (sublane)

    key = jax.random.PRNGKey(0)
    kx, kp_ = jax.random.split(key)
    x = jax.random.normal(kx, (B, input_dim), jnp.float32)
    raw_params = init_params(kp_, input_dim, hidden_1, op_dim)
    ref_sig, ref_hid = reference_forward(x, raw_params)

    # ---- all-f32 path: tight correctness check vs. the reference ----
    params_f32 = prepare_params(raw_params, fc2_dtype=jnp.float32)
    out_sig, out_hid = fcnet_forward(x, params_f32, hidden_1, op_dim)
    jax.block_until_ready((out_sig, out_hid))
    assert out_sig.shape == (B, op_dim) and out_hid.shape == (B, hidden_1)
    assert jnp.allclose(out_sig, ref_sig, atol=1e-4, rtol=1e-4)
    assert jnp.allclose(out_hid, ref_hid, atol=1e-4, rtol=1e-4)

    # ---- bf16-fc2 path (v6e/v7x-preferred MXU format) ----
    # fc1 + BN stay in f32, so the hidden output remains tight; only the
    # sigmoid output carries bf16 fc2 rounding.
    params_bf16 = prepare_params(raw_params, fc2_dtype=jnp.bfloat16)
    out_sig_bf, out_hid_bf = fcnet_forward(x, params_bf16, hidden_1, op_dim)
    jax.block_until_ready((out_sig_bf, out_hid_bf))
    assert jnp.allclose(out_sig_bf, ref_sig, atol=3e-2, rtol=3e-2)
    assert jnp.allclose(out_hid_bf, ref_hid, atol=1e-4, rtol=1e-4)

    # ---- optional bf16 hidden writeback (halves the dominant HBM write at
    #      scale; BN/ReLU math still f32, cast only at the store) ----
    out_sig_bh, out_hid_bh = fcnet_forward(x, params_bf16, hidden_1, op_dim,
                                           hidden_dtype=jnp.bfloat16)
    jax.block_until_ready((out_sig_bh, out_hid_bh))
    assert out_hid_bh.dtype == jnp.bfloat16
    assert jnp.allclose(out_sig_bh, ref_sig, atol=3e-2, rtol=3e-2)
    assert jnp.allclose(out_hid_bh.astype(jnp.float32), ref_hid,
                        atol=2e-2, rtol=2e-2)

    print("KERNEL_OK")
</pallas_src>

<mosaic_0001>
module attributes {stable_mosaic.version = 11 : i64} {
  func.func @fcnet_kernel(%arg0: memref<8x24xf32, #tpu.memory_space<vmem>>, %arg1: memref<24x256xf32, #tpu.memory_space<vmem>>, %arg2: memref<1x256xf32, #tpu.memory_space<vmem>>, %arg3: memref<1x256xf32, #tpu.memory_space<vmem>>, %arg4: memref<256x128xf32, #tpu.memory_space<vmem>>, %arg5: memref<1x128xf32, #tpu.memory_space<vmem>>, %arg6: memref<8x128xf32, #tpu.memory_space<vmem>>, %arg7: memref<8x256xf32, #tpu.memory_space<vmem>>) attributes {dimension_semantics = [], scalar_prefetch = 0 : i64, scratch_operands = 0 : i64, tpu.core_type = #tpu.core_type<tc>} {
    %c0 = arith.constant 0 : index
    %c0_0 = arith.constant 0 : index
    %0 = vector.load %arg0[%c0, %c0_0] : memref<8x24xf32, #tpu.memory_space<vmem>>, vector<8x24xf32>
    %c0_1 = arith.constant 0 : index
    %c0_2 = arith.constant 0 : index
    %1 = vector.load %arg1[%c0_1, %c0_2] : memref<24x256xf32, #tpu.memory_space<vmem>>, vector<24x256xf32>
    %cst = arith.constant dense<0.000000e+00> : vector<8x256xf32>
    %2 = tpu.matmul %0, %1, %cst {dimension_numbers = #tpu.dot_dimension_numbers<[1], [0], [0], [1], [0, 0, 1, 1], [], []>} : vector<8x24xf32>, vector<24x256xf32>, vector<8x256xf32> -> vector<8x256xf32>
    %cst_3 = arith.constant dense<0.000000e+00> : vector<256xf32>
    %3 = vector.multi_reduction <add>, %2, %cst_3 [0] : vector<8x256xf32> to vector<256xf32>
    %4 = vector.shape_cast %3 : vector<256xf32> to vector<1x256xf32>
    %cst_4 = arith.constant 8.000000e+00 : f32
    %5 = vector.broadcast %cst_4 : f32 to vector<1x256xf32>
    %6 = arith.divf %4, %5 : vector<1x256xf32>
    %7 = vector.broadcast %6 : vector<1x256xf32> to vector<8x256xf32>
    %8 = arith.subf %2, %7 : vector<8x256xf32>
    %9 = arith.mulf %8, %8 : vector<8x256xf32>
    %cst_5 = arith.constant dense<0.000000e+00> : vector<256xf32>
    %10 = vector.multi_reduction <add>, %9, %cst_5 [0] : vector<8x256xf32> to vector<256xf32>
    %11 = vector.shape_cast %10 : vector<256xf32> to vector<1x256xf32>
    %cst_6 = arith.constant 8.000000e+00 : f32
    %12 = vector.broadcast %cst_6 : f32 to vector<1x256xf32>
    %13 = arith.divf %11, %12 : vector<1x256xf32>
    %c0_7 = arith.constant 0 : index
    %c0_8 = arith.constant 0 : index
    %14 = vector.load %arg2[%c0_7, %c0_8] : memref<1x256xf32, #tpu.memory_space<vmem>>, vector<1x256xf32>
    %cst_9 = arith.constant 9.99999974E-6 : f32
    %15 = vector.broadcast %cst_9 : f32 to vector<1x256xf32>
    %16 = arith.addf %13, %15 : vector<1x256xf32>
    %17 = math.rsqrt %16 : vector<1x256xf32>
    %18 = arith.mulf %14, %17 : vector<1x256xf32>
    %c0_10 = arith.constant 0 : index
    %c0_11 = arith.constant 0 : index
    %19 = vector.load %arg3[%c0_10, %c0_11] : memref<1x256xf32, #tpu.memory_space<vmem>>, vector<1x256xf32>
    %20 = arith.mulf %6, %18 : vector<1x256xf32>
    %21 = arith.subf %19, %20 : vector<1x256xf32>
    %22 = vector.broadcast %18 : vector<1x256xf32> to vector<8x256xf32>
    %23 = arith.mulf %2, %22 : vector<8x256xf32>
    %24 = vector.broadcast %21 : vector<1x256xf32> to vector<8x256xf32>
    %25 = arith.addf %23, %24 : vector<8x256xf32>
    %cst_12 = arith.constant 0.000000e+00 : f32
    %26 = vector.broadcast %cst_12 : f32 to vector<8x256xf32>
    %27 = arith.maximumf %25, %26 : vector<8x256xf32>
    %c0_13 = arith.constant 0 : index
    %c0_14 = arith.constant 0 : index
    %28 = vector.load %arg7[%c0_13, %c0_14] : memref<8x256xf32, #tpu.memory_space<vmem>>, vector<8x256xf32>
    tpu.vector_store %arg7[%c0_13, %c0_14], %27 {strides = array<i32>} : memref<8x256xf32, #tpu.memory_space<vmem>>, vector<8x256xf32>,
    %c0_15 = arith.constant 0 : index
    %c0_16 = arith.constant 0 : index
    %29 = vector.load %arg4[%c0_15, %c0_16] : memref<256x128xf32, #tpu.memory_space<vmem>>, vector<256x128xf32>
    %cst_17 = arith.constant dense<0.000000e+00> : vector<8x128xf32>
    %30 = tpu.matmul %27, %29, %cst_17 {dimension_numbers = #tpu.dot_dimension_numbers<[1], [0], [0], [1], [0, 0, 1, 1], [], []>} : vector<8x256xf32>, vector<256x128xf32>, vector<8x128xf32> -> vector<8x128xf32>
    %c0_18 = arith.constant 0 : index
    %c0_19 = arith.constant 0 : index
    %31 = vector.load %arg5[%c0_18, %c0_19] : memref<1x128xf32, #tpu.memory_space<vmem>>, vector<1x128xf32>
    %32 = vector.broadcast %31 : vector<1x128xf32> to vector<8x128xf32>
    %33 = arith.addf %30, %32 : vector<8x128xf32>
    %34 = arith.negf %33 : vector<8x128xf32>
    %35 = math.exp %34 : vector<8x128xf32>
    %cst_20 = arith.constant 1.000000e+00 : f32
    %36 = vector.broadcast %cst_20 : f32 to vector<8x128xf32>
    %37 = arith.addf %36, %35 : vector<8x128xf32>
    %38 = arith.divf %36, %37 : vector<8x128xf32>
    %c0_21 = arith.constant 0 : index
    %c0_22 = arith.constant 0 : index
    %39 = vector.load %arg6[%c0_21, %c0_22] : memref<8x128xf32, #tpu.memory_space<vmem>>, vector<8x128xf32>
    tpu.vector_store %arg6[%c0_21, %c0_22], %38 {strides = array<i32>} : memref<8x128xf32, #tpu.memory_space<vmem>>, vector<8x128xf32>,
    return
  }
}

</mosaic_0001>

<llo_original>
// kernel: fcnet_forward.1
$region0: #{fcnet_forward.1}
  #allocation0 [shape = 'u32[]', space=smem, size = 0x4, offset = 0x4, fixed_abs, tag = 'smem constant byte address 0x4 - core index']
  #allocation1 [shape = 'u32[144,128]{1,0:T(1,128)}', space=vmem, size = 0x12000, scoped, tag = 'internal scratch']
  %s0 = inlined_call_operand.vmem [shape: f32[8,24], index: 0, kind: input, shape index: {}]
  %s1 = inlined_call_operand.hbm [shape: f32[24,256], index: 1, kind: input, shape index: {}]
  %s2 = inlined_call_operand.vmem [shape: f32[1,256], index: 2, kind: input, shape index: {}]
  %s3 = inlined_call_operand.vmem [shape: f32[1,256], index: 3, kind: input, shape index: {}]
  %s4 = inlined_call_operand.hbm [shape: f32[256,128], index: 4, kind: input, shape index: {}]
  %s5 = inlined_call_operand.vmem [shape: f32[1,128], index: 5, kind: input, shape index: {}]
  %s6 = inlined_call_operand.hbm [shape: f32[8,128], index: 6, kind: output, shape index: {0}]
  %s7 = inlined_call_operand.hbm [shape: f32[8,256], index: 7, kind: output, shape index: {1}]
  %8 = xla_tuple %s6, %s7
  %s9 = sld [smem:[#allocation0]]
  $region50: #{fcnet_forward.1} parent=0
    _
  %s11 = ssub.s32 1, %s9
  %s12 = scalar_select 0, %s11, %s9
  $region1: #{fcnet_forward.1} parent=0
    #allocation2 [shape = 'u8[24576]{0}', space=vmem, size = 0x6000, scoped, tag = 'input window, operand 1, single buffered']
    #allocation3 [shape = 's32[1]{0}', space=sflag, size = 0x4, scoped, tag = 'scoped memory for fcnet_forward.1']
    #allocation4 [shape = 's32[1]{0}', space=sflag, size = 0x4, scoped, tag = 'scoped memory for fcnet_forward.1']
    #allocation5 [shape = 'u8[131072]{0}', space=vmem, size = 0x20000, scoped, tag = 'input window, operand 4, single buffered']
    #allocation6 [shape = 's32[1]{0}', space=sflag, size = 0x4, scoped, tag = 'scoped memory for fcnet_forward.1']
    #allocation7 [shape = 'u8[4096]{0}', space=vmem, size = 0x1000, scoped, tag = 'output window, operand 0, single buffered']
    #allocation8 [shape = 'u8[8192]{0}', space=vmem, size = 0x2000, scoped, tag = 'output window, operand 1, single buffered']
    #allocation9 [shape = 's32[1]{0}', space=sflag, size = 0x4, scoped, tag = 'scoped memory for fcnet_forward.1']
    %13 = vsyncpa [#allocation3], 0
    %14 = vsyncpa [#allocation6], 0
    %15 = vsyncpa [#allocation4], 0
    %16 = vsyncpa [#allocation9], 0
    // Predicated region
    $region2: #{fcnet_forward.1} parent=1 // pred_check
      _
    $region3: #{fcnet_forward.1} parent=1 // pred_check_branch
      %18 = sbr.rel (0) target = $region5
    $region4: #{fcnet_forward.1} parent=1 // pred_region
      _
    $region5: #{fcnet_forward.1} parent=1 // pred_fallthru
      _
    // Predicated region
    $region6: #{fcnet_forward.1} parent=1 // pred_check
      _
    $region7: #{fcnet_forward.1} parent=1 // pred_check_branch
      %20 = sbr.rel (0) target = $region9
    $region8: #{fcnet_forward.1} parent=1 // pred_region
      %s22 = ssub.s32 768, 768
      %23 = vsyncadd [#allocation3], %s22
      %s24 = sshll.u32 [#allocation2], 4
      %s25 = int_to_ptr.vmem [resolvable:$true] %s24
      %30 = dma.hbm_to_vmem [thread:$0]  %s1, 768, %s25, [#allocation3], 256, 256, 16
    $region9: #{fcnet_forward.1} parent=1 // pred_fallthru
      _
    // Predicated region
    $region10: #{fcnet_forward.1} parent=1 // pred_check
      _
    $region11: #{fcnet_forward.1} parent=1 // pred_check_branch
      %32 = sbr.rel (0) target = $region13
    $region12: #{fcnet_forward.1} parent=1 // pred_region
      _
    $region13: #{fcnet_forward.1} parent=1 // pred_fallthru
      _
    // Predicated region
    $region14: #{fcnet_forward.1} parent=1 // pred_check
      _
    $region15: #{fcnet_forward.1} parent=1 // pred_check_branch
      %34 = sbr.rel (0) target = $region17
    $region16: #{fcnet_forward.1} parent=1 // pred_region
      _
    $region17: #{fcnet_forward.1} parent=1 // pred_fallthru
      _
    // Predicated region
    $region18: #{fcnet_forward.1} parent=1 // pred_check
      _
    $region19: #{fcnet_forward.1} parent=1 // pred_check_branch
      %36 = sbr.rel (0) target = $region21
    $region20: #{fcnet_forward.1} parent=1 // pred_region
      %s38 = ssub.s32 4096, 4096
      %39 = vsyncadd [#allocation6], %s38
      %s40 = sshll.u32 [#allocation5], 4
      %s41 = int_to_ptr.vmem [resolvable:$true] %s40
      %46 = dma.hbm_to_vmem [thread:$0]  %s4, 4096, %s41, [#allocation6], 128, 128, 8
    $region21: #{fcnet_forward.1} parent=1 // pred_fallthru
      _
    // Predicated region
    $region22: #{fcnet_forward.1} parent=1 // pred_check
      _
    $region23: #{fcnet_forward.1} parent=1 // pred_check_branch
      %48 = sbr.rel (0) target = $region25
    $region24: #{fcnet_forward.1} parent=1 // pred_region
      _
    $region25: #{fcnet_forward.1} parent=1 // pred_fallthru
      _
    // Predicated region
    $region26: #{fcnet_forward.1} parent=1 // pred_check
      _
    $region27: #{fcnet_forward.1} parent=1 // pred_check_branch
      %50 = sbr.rel (0) target = $region29
    $region28: #{fcnet_forward.1} parent=1 // pred_region
      %51 = dma.done [#allocation3], 768
    $region29: #{fcnet_forward.1} parent=1 // pred_fallthru
      _
    // Predicated region
    $region30: #{fcnet_forward.1} parent=1 // pred_check
      _
    $region31: #{fcnet_forward.1} parent=1 // pred_check_branch
      %53 = sbr.rel (0) target = $region33
    $region32: #{fcnet_forward.1} parent=1 // pred_region
      %54 = dma.done [#allocation6], 4096
    $region33: #{fcnet_forward.1} parent=1 // pred_fallthru
      _
    %v55 = vld [vmem:[%s0] sm:$0xff]
    %v56 = vld [vmem:[#allocation2] sm:$0xff]
    %v57 = vld [vmem:[#allocation2 + $0x8] sm:$0xff]
    %v58 = vld [vmem:[#allocation2 + $0x10] sm:$0xff]
    %v59 = vld [vmem:[#allocation2 + $0x18] sm:$0xff]
    %v60 = vld [vmem:[#allocation2 + $0x20] sm:$0xff]
    %v61 = vld [vmem:[#allocation2 + $0x28] sm:$0xff]
    %vm62 = vcmask 195584
    %v64 = vsel %vm62, %v55, 0
    %66 = vmatprep.subr.mxu0 %v57
    %67 = vmatpush1.msra.mxu0 %v56
    %68 = vmatprep.subr.mxu0 %v59
    %69 = vmatpush1.msra.mxu0 %v58
    %70 = vmatprep.subr.mxu0 %v61
    %71 = vmatpush1.msra.mxu0 %v60
    %72 = vmatprep.subr.mxu0 0.0
    %73 = vmatpush1.msra.mxu0 0.0
    %74 = vmatprep.subr.mxu0 0.0
    %75 = vmatpush1.msra.mxu0 0.0
    %76 = vmatprep.subr.mxu0 0.0
    %77 = vmatpush1.msra.mxu0 0.0
    %78 = vmatprep.subr.mxu0 0.0
    %79 = vmatpush1.msra.mxu0 0.0
    %80 = vmatprep.subr.mxu0 0.0
    %81 = vmatpush1.msra.mxu0 0.0
    %82 = vmatprep.subr.mxu0 0.0
    %83 = vmatpush1.msra.mxu0 0.0
    %84 = vmatprep.subr.mxu0 0.0
    %85 = vmatpush1.msra.mxu0 0.0
    %86 = vmatprep.subr.mxu0 0.0
    %87 = vmatpush1.msra.mxu0 0.0
    %88 = vmatprep.subr.mxu0 0.0
    %89 = vmatpush1.msra.mxu0 0.0
    %90 = vmatprep.subr.mxu0 0.0
    %91 = vmatpush1.msra.mxu0 0.0
    %92 = vmatprep.subr.mxu0 0.0
    %93 = vmatpush1.msra.mxu0 0.0
    %94 = vmatprep.subr.mxu0 0.0
    %95 = vmatpush1.msra.mxu0 0.0
    %96 = vmatprep.subr.mxu0 0.0
    %97 = vmatpush1.msra.mxu0 0.0
    %98 = vmatprep.subr.mxu0 0.0
    %99 = vmatpush1.msra.mxu0 0.0
    %100 = vmatprep.subr.mxu0 0.0
    %101 = vmatpush1.msra.mxu0 0.0
    %102 = vmatprep.subr.mxu0 0.0
    %103 = vmatpush1.msra.mxu0 0.0
    %104 = vmatprep.subr.mxu0 0.0
    %105 = vmatpush1.msra.mxu0 0.0
    %106 = vmatprep.subr.mxu0 0.0
    %107 = vmatpush1.msra.mxu0 0.0
    %108 = vmatprep.subr.mxu0 0.0
    %109 = vmatpush1.msra.mxu0 0.0
    %110 = vmatprep.subr.mxu0 0.0
    %111 = vmatpush1.msra.mxu0 0.0
    %112 = vmatprep.subr.mxu0 0.0
    %113 = vmatpush1.msra.mxu0 0.0
    %114 = vmatprep.subr.mxu0 0.0
    %115 = vmatpush1.msra.mxu0 0.0
    %116 = vmatprep.subr.mxu0 0.0
    %117 = vmatpush1.msra.mxu0 0.0
    %118 = vmatprep.subr.mxu0 0.0
    %119 = vmatpush1.msra.mxu0 0.0
    %120 = vmatprep.subr.mxu0 0.0
    %121 = vmatpush1.msra.mxu0 0.0
    %122 = vmatprep.subr.mxu0 0.0
    %123 = vmatpush1.msra.mxu0 0.0
    %124 = vmatprep.subr.mxu0 0.0
    %125 = vmatpush1.msra.mxu0 0.0
    %126 = vmatprep.subr.mxu0 0.0
    %127 = vmatpush1.msra.mxu0 0.0
    %128 = vmatprep.subr.mxu0 0.0
    %129 = vmatpush1.msra.mxu0 0.0
    %130 = vmatprep.mubr.f32.mxu0 0.0
    %131 = vmatmul.mubr.f32.gmra.mrb[0].mxu0 %v64
    %v132 = vpop.f32.mrb[0].mxu0
    %v133 = vadd.f32 0.0, %v132
    %v134 = vpop.f32.mrb[0].mxu0
    %v135 = vadd.f32 0.0, %v134
    %136 = vdwg.mxu0
    %v137 = vrot.slane %v133, 4
    %v138 = vadd.f32 %v133, %v137
    %v139 = vrot.slane %v138, 2
    %v140 = vadd.f32 %v138, %v139
    %v141 = vrot.slane %v140, 1
    %v142 = vadd.f32 %v140, %v141
    %v143 = vrot.slane %v135, 4
    %v144 = vadd.f32 %v135, %v143
    %v145 = vrot.slane %v144, 2
    %v146 = vadd.f32 %v144, %v145
    %v147 = vrot.slane %v146, 1
    %v148 = vadd.f32 %v146, %v147
    %v149 = vrcp.pop 8.0
    %v150 = vmul.f32 %v142, %v149
    %v151 = vmul.f32 %v148, %v149
    %v152 = vsub.f32 %v133, %v150
    %v153 = vsub.f32 %v135, %v151
    %v154 = vmul.f32 %v152, %v152
    %v155 = vmul.f32 %v153, %v153
    %v156 = vrot.slane %v154, 4
    %v157 = vadd.f32 %v154, %v156
    %v158 = vrot.slane %v157, 2
    %v159 = vadd.f32 %v157, %v158
    %v160 = vrot.slane %v159, 1
    %v161 = vadd.f32 %v159, %v160
    %v162 = vrot.slane %v155, 4
    %v163 = vadd.f32 %v155, %v162
    %v164 = vrot.slane %v163, 2
    %v165 = vadd.f32 %v163, %v164
    %v166 = vrot.slane %v165, 1
    %v167 = vadd.f32 %v165, %v166
    %v168 = vmul.f32 %v161, %v149
    %v169 = vmul.f32 %v167, %v149
    %v170 = vld [vmem:[%s2] sm:$0x3]
    %v171 = vadd.f32 %v168, 1e-05
    %v172 = vadd.f32 %v169, 1e-05
    %v173 = vrsqrt.pop %v171
    %v174 = vrsqrt.pop %v172
    %v177 = vcombine.low %v173, %v174
    %v179 = vunpack.c.l.s4 1966171168
    %v180 = vunpack.c.0.s8 %v179
    %v181 = vlaneseq
    %v182 = vshrl.u32 %v181, 7
    %v183 = vsub.s32 %v180, %v182
    %v184 = vrot.slane %v177, %v183
    %v186 = vunpack.c.l.s4 1966171168
    %v187 = vunpack.c.0.s8 %v186
    %v188 = vlaneseq
    %v189 = vshrl.u32 %v188, 7
    %v190 = vsub.s32 %v187, %v189
    %v191 = vrot.slane %v184, %v190
    %v193 = vmul.f32 %v170, %v191
    %v194 = vld [vmem:[%s3] sm:$0x3]
    %v196 = vlaneseq
    %v197 = vshrl.u32 %v196, 7
    %v198 = vsub.s32 0, %v197
    %v199 = vrot.slane %v193, %v198
    %v200 = vlaneseq
    %v201 = vshrl.u32 %v200, 7
    %v202 = vsub.s32 1, %v201
    %v203 = vrot.slane %v193, %v202
    %v206 = vmul.f32 %v150, %v199
    %v207 = vmul.f32 %v151, %v203
    %v210 = vcombine.low %v206, %v207
    %v212 = vunpack.c.l.s4 1966171168
    %v213 = vunpack.c.0.s8 %v212
    %v214 = vlaneseq
    %v215 = vshrl.u32 %v214, 7
    %v216 = vsub.s32 %v213, %v215
    %v217 = vrot.slane %v210, %v216
    %v219 = vunpack.c.l.s4 1966171168
    %v220 = vunpack.c.0.s8 %v219
    %v221 = vlaneseq
    %v222 = vshrl.u32 %v221, 7
    %v223 = vsub.s32 %v220, %v222
    %v224 = vrot.slane %v217, %v223
    %v226 = vsub.f32 %v194, %v224
    %v227 = vmul.f32 %v133, %v199
    %v228 = vmul.f32 %v135, %v203
    %v230 = vlaneseq
    %v231 = vshrl.u32 %v230, 7
    %v232 = vsub.s32 0, %v231
    %v233 = vrot.slane %v226, %v232
    %v234 = vlaneseq
    %v235 = vshrl.u32 %v234, 7
    %v236 = vsub.s32 1, %v235
    %v237 = vrot.slane %v226, %v236
    %v240 = vadd.f32 %v227, %v233
    %v241 = vadd.f32 %v228, %v237
    %v242 = vmax.f32 %v240, 0.0
    %v243 = vmax.f32 %v241, 0.0
    %244 = vst [vmem:[#allocation8] sm:$0xff] %v242
    %245 = vst [vmem:[#allocation8 + $0x8] sm:$0xff] %v243
    %v246 = vld [vmem:[#allocation5] sm:$0xff]
    %v247 = vld [vmem:[#allocation5 + $0x8] sm:$0xff]
    %v248 = vld [vmem:[#allocation5 + $0x10] sm:$0xff]
    %v249 = vld [vmem:[#allocation5 + $0x18] sm:$0xff]
    %v250 = vld [vmem:[#allocation5 + $0x20] sm:$0xff]
    %v251 = vld [vmem:[#allocation5 + $0x28] sm:$0xff]
    %v252 = vld [vmem:[#allocation5 + $0x30] sm:$0xff]
    %v253 = vld [vmem:[#allocation5 + $0x38] sm:$0xff]
    %v254 = vld [vmem:[#allocation5 + $0x40] sm:$0xff]
    %v255 = vld [vmem:[#allocation5 + $0x48] sm:$0xff]
    %v256 = vld [vmem:[#allocation5 + $0x50] sm:$0xff]
    %v257 = vld [vmem:[#allocation5 + $0x58] sm:$0xff]
    %v258 = vld [vmem:[#allocation5 + $0x60] sm:$0xff]
    %v259 = vld [vmem:[#allocation5 + $0x68] sm:$0xff]
    %v260 = vld [vmem:[#allocation5 + $0x70] sm:$0xff]
    %v261 = vld [vmem:[#allocation5 + $0x78] sm:$0xff]
    %v262 = vld [vmem:[#allocation5 + $0x80] sm:$0xff]
    %v263 = vld [vmem:[#allocation5 + $0x88] sm:$0xff]
    %v264 = vld [vmem:[#allocation5 + $0x90] sm:$0xff]
    %v265 = vld [vmem:[#allocation5 + $0x98] sm:$0xff]
    %v266 = vld [vmem:[#allocation5 + $0xa0] sm:$0xff]
    %v267 = vld [vmem:[#allocation5 + $0xa8] sm:$0xff]
    %v268 = vld [vmem:[#allocation5 + $0xb0] sm:$0xff]
    %v269 = vld [vmem:[#allocation5 + $0xb8] sm:$0xff]
    %v270 = vld [vmem:[#allocation5 + $0xc0] sm:$0xff]
    %v271 = vld [vmem:[#allocation5 + $0xc8] sm:$0xff]
    %v272 = vld [vmem:[#allocation5 + $0xd0] sm:$0xff]
    %v273 = vld [vmem:[#allocation5 + $0xd8] sm:$0xff]
    %v274 = vld [vmem:[#allocation5 + $0xe0] sm:$0xff]
    %v275 = vld [vmem:[#allocation5 + $0xe8] sm:$0xff]
    %v276 = vld [vmem:[#allocation5 + $0xf0] sm:$0xff]
    %v277 = vld [vmem:[#allocation5 + $0xf8] sm:$0xff]
    %v278 = vld [vmem:[%s5] sm:$0x1]
    %v280 = vlaneseq
    %v281 = vshrl.u32 %v280, 7
    %v282 = vsub.s32 0, %v281
    %v283 = vrot.slane %v278, %v282
    %285 = vmatprep.subr.mxu0 0.0
    %286 = vmatpush1.msra.mxu0 %v246
    %287 = vmatprep.subr.mxu0 0.0
    %288 = vmatpush1.msra.mxu0 %v247
    %289 = vmatprep.subr.mxu0 0.0
    %290 = vmatpush1.msra.mxu0 %v248
    %291 = vmatprep.subr.mxu0 0.0
    %292 = vmatpush1.msra.mxu0 %v249
    %293 = vmatprep.subr.mxu0 0.0
    %294 = vmatpush1.msra.mxu0 %v250
    %295 = vmatprep.subr.mxu0 0.0
    %296 = vmatpush1.msra.mxu0 %v251
    %297 = vmatprep.subr.mxu0 0.0
    %298 = vmatpush1.msra.mxu0 %v252
    %299 = vmatprep.subr.mxu0 0.0
    %300 = vmatpush1.msra.mxu0 %v253
    %301 = vmatprep.subr.mxu0 0.0
    %302 = vmatpush1.msra.mxu0 %v254
    %303 = vmatprep.subr.mxu0 0.0
    %304 = vmatpush1.msra.mxu0 %v255
    %305 = vmatprep.subr.mxu0 0.0
    %306 = vmatpush1.msra.mxu0 %v256
    %307 = vmatprep.subr.mxu0 0.0
    %308 = vmatpush1.msra.mxu0 %v257
    %309 = vmatprep.subr.mxu0 0.0
    %310 = vmatpush1.msra.mxu0 %v258
    %311 = vmatprep.subr.mxu0 0.0
    %312 = vmatpush1.msra.mxu0 %v259
    %313 = vmatprep.subr.mxu0 0.0
    %314 = vmatpush1.msra.mxu0 %v260
    %315 = vmatprep.subr.mxu0 0.0
    %316 = vmatpush1.msra.mxu0 %v261
    %317 = vmatprep.subr.mxu0 0.0
    %318 = vmatpush1.msra.mxu0 %v262
    %319 = vmatprep.subr.mxu0 0.0
    %320 = vmatpush1.msra.mxu0 %v263
    %321 = vmatprep.subr.mxu0 0.0
    %322 = vmatpush1.msra.mxu0 %v264
    %323 = vmatprep.subr.mxu0 0.0
    %324 = vmatpush1.msra.mxu0 %v265
    %325 = vmatprep.subr.mxu0 0.0
    %326 = vmatpush1.msra.mxu0 %v266
    %327 = vmatprep.subr.mxu0 0.0
    %328 = vmatpush1.msra.mxu0 %v267
    %329 = vmatprep.subr.mxu0 0.0
    %330 = vmatpush1.msra.mxu0 %v268
    %331 = vmatprep.subr.mxu0 0.0
    %332 = vmatpush1.msra.mxu0 %v269
    %333 = vmatprep.subr.mxu0 0.0
    %334 = vmatpush1.msra.mxu0 %v270
    %335 = vmatprep.subr.mxu0 0.0
    %336 = vmatpush1.msra.mxu0 %v271
    %337 = vmatprep.subr.mxu0 0.0
    %338 = vmatpush1.msra.mxu0 %v272
    %339 = vmatprep.subr.mxu0 0.0
    %340 = vmatpush1.msra.mxu0 %v273
    %341 = vmatprep.subr.mxu0 0.0
    %342 = vmatpush1.msra.mxu0 %v274
    %343 = vmatprep.subr.mxu0 0.0
    %344 = vmatpush1.msra.mxu0 %v275
    %345 = vmatprep.subr.mxu0 0.0
    %346 = vmatpush1.msra.mxu0 %v276
    %347 = vmatprep.subr.mxu0 0.0
    %348 = vmatpush1.msra.mxu0 %v277
    %349 = vmatprep.mubr.f32.mxu0 %v243
    %350 = vmatmul.mubr.f32.gmra.mrb[0].mxu0 %v242
    %v351 = vpop.f32.mrb[0].mxu0
    %v352 = vadd.f32 %v283, %v351
    %v353 = vpop.f32.mrb[0].mxu0
    %354 = vdwg.mxu0
    %v355 = vxor.u32 %v352, 2147483648
    %v356 = vmul.f32 %v355, 1.442695
    %v357 = vpow.pop %v356
    %v358 = vadd.f32 %v357, 1.0
    %v359 = vrcp.pop %v358
    %v360 = vmul.f32 1.0, %v359
    %361 = vst [vmem:[#allocation7] sm:$0xff] %v360
    // Predicated region
    $region34: #{fcnet_forward.1} parent=1 // pred_check
      _
    $region35: #{fcnet_forward.1} parent=1 // pred_check_branch
      %363 = sbr.rel (0) target = $region37
    $region36: #{fcnet_forward.1} parent=1 // pred_region
      %s365 = ssub.s32 128, 128
      %366 = vsyncadd [#allocation4], %s365
      %s368 = sshll.u32 [#allocation7], 4
      %s369 = int_to_ptr.vmem [resolvable:$true] %s368
      %371 = dma.vmem_to_hbm [thread:$0]  %s369, 128, %s6, [#allocation4]
    $region37: #{fcnet_forward.1} parent=1 // pred_fallthru
      _
    // Predicated region
    $region38: #{fcnet_forward.1} parent=1 // pred_check
      _
    $region39: #{fcnet_forward.1} parent=1 // pred_check_branch
      %373 = sbr.rel (0) target = $region41
    $region40: #{fcnet_forward.1} parent=1 // pred_region
      %s375 = ssub.s32 256, 256
      %376 = vsyncadd [#allocation9], %s375
      %s378 = sshll.u32 [#allocation8], 4
      %s379 = int_to_ptr.vmem [resolvable:$true] %s378
      %381 = dma.vmem_to_hbm [thread:$0]  %s379, 256, %s7, [#allocation9]
    $region41: #{fcnet_forward.1} parent=1 // pred_fallthru
      _
    // Predicated region
    $region42: #{fcnet_forward.1} parent=1 // pred_check
      _
    $region43: #{fcnet_forward.1} parent=1 // pred_check_branch
      %383 = sbr.rel (0) target = $region45
    $region44: #{fcnet_forward.1} parent=1 // pred_region
      %384 = dma.done [#allocation4], 128
    $region45: #{fcnet_forward.1} parent=1 // pred_fallthru
      _
    // Predicated region
    $region46: #{fcnet_forward.1} parent=1 // pred_check
      _
    $region47: #{fcnet_forward.1} parent=1 // pred_check_branch
      %386 = sbr.rel (0) target = $region49
    $region48: #{fcnet_forward.1} parent=1 // pred_region
      %387 = dma.done [#allocation9], 256
    $region49: #{fcnet_forward.1} parent=1 // pred_fallthru
      _
    %388 = vsyncpa [#allocation3], 1
    %389 = vsyncpa [#allocation6], 1
    %390 = vsyncpa [#allocation4], 1
    %391 = vsyncpa [#allocation9], 1

</llo_original>
